<compile_context>
chip_gen: v6e
topology: v6e:2x2x1
jax: 0.10.0
libtpu: 0.0.40
codegen_flags: <defaults>
</compile_context>

<pallas_src>
import numpy as np
import jax
import jax.numpy as jnp
from jax.experimental import pallas as pl
from jax.experimental.pallas import tpu as pltpu


def _rotary_kernel(pos_ref, band_ref, x_ref, o_ref):
    # pos_ref:  (tm, 1)  f32  positions for this row tile
    # band_ref: (1,  H)  f32  signed interleaved band: [-b0,+b0,-b1,+b1,...]
    # x_ref:    (tm, H)       interleaved features (even lanes = x1, odd = x2)
    # o_ref:    (tm, H)       rotated output, same interleaved layout
    x = x_ref[...].astype(jnp.float32)
    t = pos_ref[...] * band_ref[...]            # (tm, H); |t[:,2k]| == |t[:,2k+1]|
    c = jnp.cos(t)                              # cos is even -> sign-free
    s = jnp.sin(t)                              # sin is odd  -> carries -/+ per lane

    h = x.shape[-1]
    # Pair swap: swap[2k] = x[2k+1], swap[2k+1] = x[2k].
    # Two XLU rotates (free slot) + one VPU select; wrap-around lanes are never
    # selected because h is even.
    x_next = pltpu.roll(x, h - 1, 1)            # x_next[:, j] = x[:, (j+1) % h]
    x_prev = pltpu.roll(x, 1, 1)                # x_prev[:, j] = x[:, (j-1) % h]
    lane = jax.lax.broadcasted_iota(jnp.int32, x.shape, 1)
    x_swap = jnp.where((lane & 1) == 0, x_next, x_prev)

    # out[2k]   = x[2k]  *cos_k - x[2k+1]*sin_k
    # out[2k+1] = x[2k+1]*cos_k + x[2k]  *sin_k
    o_ref[...] = (x * c + x_swap * s).astype(o_ref.dtype)


def make_rotary_band(angle_cycle: int, d_hid: int) -> jnp.ndarray:
    """Deterministic buffer matching RotaryEncoder.__init__ (shape (1, d_hid//2))."""
    h2 = d_hid // 2
    exponent = jnp.arange(0, h2, dtype=jnp.float32) * (-2.0 / d_hid)
    band = jnp.power(jnp.float32(angle_cycle * 2.0 * np.pi), exponent)
    return band.reshape(1, h2)


def _choose_tiling(M: int, H: int):
    """Pick (tm, grid_m). tm is a multiple of 8 and <= M (or == M when M < 8)."""
    bytes_per_row = H * 4
    # ~2 MiB x-blocks; with in+out double-buffered that's <= ~8 MiB of VMEM,
    # well under the 32 MiB scoped default on every generation (incl. v7x).
    tm_target = max(8, min(2048, ((2 << 20) // max(bytes_per_row, 1)) // 8 * 8))
    if M <= 8:
        return M, 1                      # single block equal to the full array
    tm = min(tm_target, (M // 8) * 8)
    grid_m = pl.cdiv(M, tm)
    if grid_m == 1 and M >= 16:
        # >=2 grid steps so the "parallel" axis shards over v7x's 2 TensorCores.
        tm = max(8, ((pl.cdiv(M, 2) + 7) // 8) * 8)
        grid_m = pl.cdiv(M, tm)
    return tm, grid_m


def rotary_encoder_forward(pos, x, band):
    """Pallas implementation of RotaryEncoder.forward(pos, x).

    pos:  (B, S)          any real/int dtype (cast to float32 like pos.float())
    x:    (B, S, d_hid)   float32 (or bf16)
    band: (1, d_hid//2)   float32
    returns (B, S, d_hid) same dtype as x
    """
    B, S, H = x.shape
    H2 = H // 2
    assert H % 2 == 0 and band.shape[-1] == H2
    M = B * S

    # ---- layout glue: free reshapes only, no de-interleave / padding copies ----
    pos_f = pos.astype(jnp.float32).reshape(M, 1)
    x2d = x.reshape(M, H)

    # Tiny (1, H) constant: signed interleaved band [-b0, +b0, -b1, +b1, ...].
    band1d = band.reshape(H2).astype(jnp.float32)
    band_signed = jnp.stack([-band1d, band1d], axis=-1).reshape(1, H)

    tm, grid_m = _choose_tiling(M, H)
    itemsize = jnp.dtype(x.dtype).itemsize

    out2d = pl.pallas_call(
        _rotary_kernel,
        out_shape=jax.ShapeDtypeStruct((M, H), x.dtype),
        grid_spec=pltpu.PrefetchScalarGridSpec(
            num_scalar_prefetch=0,
            grid=(grid_m,),
            in_specs=[
                pl.BlockSpec((tm, 1), lambda i: (i, 0)),    # pos
                pl.BlockSpec((1, H), lambda i: (0, 0)),     # signed band (replicated)
                pl.BlockSpec((tm, H), lambda i: (i, 0)),    # x (interleaved)
            ],
            out_specs=pl.BlockSpec((tm, H), lambda i: (i, 0)),
        ),
        compiler_params=pltpu.CompilerParams(
            dimension_semantics=("parallel",),
            vmem_limit_bytes=32 * 1024 * 1024,
        ),
        cost_estimate=pl.CostEstimate(
            flops=6 * M * H,
            transcendentals=2 * M * H,
            bytes_accessed=2 * M * H * itemsize + M * 4 + H * 4,
        ),
    )(pos_f, band_signed, x2d)

    return out2d.reshape(B, S, H)


def rotary_encoder_reference(pos, x, band):
    """Pure-JAX reference mirroring the PyTorch forward exactly."""
    H2 = band.shape[-1]
    t = pos.astype(jnp.float32)[..., None] * band.reshape(1, 1, H2)
    c = jnp.cos(t)
    s = jnp.sin(t)
    x1 = x[..., 0::2]
    x2 = x[..., 1::2]
    return jnp.stack([x1 * c - x2 * s, x2 * c + x1 * s], axis=-1).reshape(x.shape)


if __name__ == "__main__":
    ANGLE_CYCLE = 1000

    key = jax.random.PRNGKey(0)

    # Case 1: the canonical small shape (B=2, S=8, d_hid=32).
    B, S, D_HID = 2, 8, 32
    k_pos, k_x, key = jax.random.split(key, 3)
    pos = jax.random.randint(k_pos, (B, S), 0, 100, dtype=jnp.int32)
    x = jax.random.normal(k_x, (B, S, D_HID), dtype=jnp.float32)
    band = make_rotary_band(ANGLE_CYCLE, D_HID)

    out = jax.block_until_ready(rotary_encoder_forward(pos, x, band))
    ref = rotary_encoder_reference(pos, x, band)
    np.testing.assert_allclose(np.asarray(out), np.asarray(ref), rtol=1e-5, atol=1e-5)

    # Case 2: ragged row count (B*S not a multiple of 8) to exercise the
    # masked-edge-block path that replaced the old wrapper-side padding.
    B2, S2, D2 = 3, 7, 64
    k_pos2, k_x2, key = jax.random.split(key, 3)
    pos2 = jax.random.randint(k_pos2, (B2, S2), 0, 1000, dtype=jnp.int32)
    x2 = jax.random.normal(k_x2, (B2, S2, D2), dtype=jnp.float32)
    band2 = make_rotary_band(ANGLE_CYCLE, D2)

    out2 = jax.block_until_ready(rotary_encoder_forward(pos2, x2, band2))
    ref2 = rotary_encoder_reference(pos2, x2, band2)
    np.testing.assert_allclose(np.asarray(out2), np.asarray(ref2), rtol=1e-5, atol=1e-5)

    print("KERNEL_OK")
</pallas_src>

<mosaic_0001>
module attributes {stable_mosaic.version = 11 : i64} {
  func.func @_rotary_kernel(%arg0: i32, %arg1: memref<8x1xf32, #tpu.memory_space<vmem>>, %arg2: memref<1x32xf32, #tpu.memory_space<vmem>>, %arg3: memref<8x32xf32, #tpu.memory_space<vmem>>, %arg4: memref<8x32xf32, #tpu.memory_space<vmem>>) attributes {dimension_semantics = [#tpu.dimension_semantics<parallel>], iteration_bounds = array<i64: 2>, scalar_prefetch = 0 : i64, scratch_operands = 0 : i64, tpu.core_type = #tpu.core_type<tc>, window_params = [{transform_indices = @transform_0, window_bounds = array<i64: 8, 1>}, {pipeline_mode = #tpu.pipeline_mode<synchronous>, transform_indices = @transform_1, window_bounds = array<i64: 1, 32>}, {transform_indices = @transform_2, window_bounds = array<i64: 8, 32>}, {transform_indices = @transform_3, window_bounds = array<i64: 8, 32>}]} {
    %c0 = arith.constant 0 : index
    %c0_0 = arith.constant 0 : index
    %0 = vector.load %arg3[%c0, %c0_0] : memref<8x32xf32, #tpu.memory_space<vmem>>, vector<8x32xf32>
    %c0_1 = arith.constant 0 : index
    %c0_2 = arith.constant 0 : index
    %1 = vector.load %arg1[%c0_1, %c0_2] : memref<8x1xf32, #tpu.memory_space<vmem>>, vector<8x1xf32>
    %c0_3 = arith.constant 0 : index
    %c0_4 = arith.constant 0 : index
    %2 = vector.load %arg2[%c0_3, %c0_4] : memref<1x32xf32, #tpu.memory_space<vmem>>, vector<1x32xf32>
    %3 = vector.broadcast %1 : vector<8x1xf32> to vector<8x32xf32>
    %4 = vector.broadcast %2 : vector<1x32xf32> to vector<8x32xf32>
    %5 = arith.mulf %3, %4 : vector<8x32xf32>
    %6 = math.cos %5 : vector<8x32xf32>
    %7 = math.sin %5 : vector<8x32xf32>
    %c31_i32 = arith.constant 31 : i32
    %8 = tpu.dynamic_rotate %0 by %c31_i32 dim 1 : vector<8x32xf32>, i32 -> vector<8x32xf32>
    %c1_i32 = arith.constant 1 : i32
    %9 = tpu.dynamic_rotate %0 by %c1_i32 dim 1 : vector<8x32xf32>, i32 -> vector<8x32xf32>
    %10 = tpu.iota {dimensions = array<i32: 1>} : vector<8x32xi32>
    %c1_i32_5 = arith.constant 1 : i32
    %11 = vector.broadcast %c1_i32_5 : i32 to vector<8x32xi32>
    %12 = arith.andi %10, %11 : vector<8x32xi32>
    %c0_i32 = arith.constant 0 : i32
    %13 = vector.broadcast %c0_i32 : i32 to vector<8x32xi32>
    %14 = arith.cmpi eq, %12, %13 : vector<8x32xi32>
    %15 = arith.select %14, %8, %9 : vector<8x32xi1>, vector<8x32xf32>
    %16 = arith.mulf %0, %6 : vector<8x32xf32>
    %17 = arith.mulf %15, %7 : vector<8x32xf32>
    %18 = arith.addf %16, %17 : vector<8x32xf32>
    %c0_6 = arith.constant 0 : index
    %c0_7 = arith.constant 0 : index
    %19 = vector.load %arg4[%c0_6, %c0_7] : memref<8x32xf32, #tpu.memory_space<vmem>>, vector<8x32xf32>
    tpu.vector_store %arg4[%c0_6, %c0_7], %18 {strides = array<i32>} : memref<8x32xf32, #tpu.memory_space<vmem>>, vector<8x32xf32>,
    return
  }
  func.func @transform_0(%arg0: i32) -> (i32, i32) {
    %c0_i32 = arith.constant 0 : i32
    %c0_i32_0 = arith.constant 0 : i32
    return %arg0, %c0_i32 : i32, i32
  }
  func.func @transform_1(%arg0: i32) -> (i32, i32) {
    %c0_i32 = arith.constant 0 : i32
    %c0_i32_0 = arith.constant 0 : i32
    %c0_i32_1 = arith.constant 0 : i32
    return %c0_i32, %c0_i32_0 : i32, i32
  }
  func.func @transform_2(%arg0: i32) -> (i32, i32) {
    %c0_i32 = arith.constant 0 : i32
    %c0_i32_0 = arith.constant 0 : i32
    return %arg0, %c0_i32 : i32, i32
  }
  func.func @transform_3(%arg0: i32) -> (i32, i32) {
    %c0_i32 = arith.constant 0 : i32
    %c0_i32_0 = arith.constant 0 : i32
    return %arg0, %c0_i32 : i32, i32
  }
}

</mosaic_0001>

<llo_original>
// kernel: tpu_custom_call.1
$region0: #{tpu_custom_call.1}
  #allocation0 [shape = 'u32[]', space=smem, size = 0x4, offset = 0x4, fixed_abs, tag = 'smem constant byte address 0x4 - core index']
  #allocation1 [shape = 'u32[144,128]{1,0:T(1,128)}', space=vmem, size = 0x12000, scoped, tag = 'internal scratch']
  %s0 = inlined_call_operand.vmem [shape: f32[16,1], index: 0, kind: input, shape index: {}]
  %s1 = inlined_call_operand.vmem [shape: f32[1,32], index: 1, kind: input, shape index: {}]
  %s2 = inlined_call_operand.vmem [shape: f32[16,32], index: 2, kind: input, shape index: {}]
  %s3 = inlined_call_operand.hbm [shape: f32[16,32], index: 3, kind: output, shape index: {}]
  %s4 = sld [smem:[#allocation0]]
  $region45: #{tpu_custom_call.1} parent=0
    _
  %s6 = ssub.s32 1, %s4
  %s7 = scalar_select 0, %s6, %s4
  $region1: #{tpu_custom_call.1} parent=0
    #allocation2 [shape = 'u8[8192]{0}', space=vmem, size = 0x2000, scoped, tag = 'output window, operand 0']
    #allocation3 [shape = 's32[2]{0}', space=sflag, size = 0x8, scoped, tag = 'scoped memory for tpu_custom_call.1']
    %8 = vsyncpa [#allocation3], 0
    %s9 = scalar_lea.sflag [#allocation3], 1
    %10 = vsyncpa %s9, 0
    loop: start=0, step=1, limit=4
    $region2: #{tpu_custom_call.1} parent=1 // loop_pre_header
      _
    $region3: #{tpu_custom_call.1} parent=1 // loop_header
      %s12 = sphi 0, %s16
      %p13 = scmp.ge.s32.totalorder %s12, 4
      %s22 = sphi 0, %s24
      %s25 = sphi 0, %s22
      %s26 = sphi 0, %s25
      %s42 = sphi 0, %s26
      %s46 = sphi 0, %s46
      %s48 = sphi 0, %s46
      %s49 = sphi 0, %s48
      %s63 = sphi 0, %s49
      %s69 = sphi 0, %s71
      %s72 = sphi 0, %s69
      %s73 = sphi 0, %s72
      %s89 = sphi 0, %s73
      %s95 = sphi 0, %s97
      %s98 = sphi 0, %s95
      %s99 = sphi 0, %s98
      %s115 = sphi 0, %s99
    $region4: #{tpu_custom_call.1} parent=1 // loop_header_branch
      %15 = sbr.rel (%p13) target = $region8
    $region5: #{tpu_custom_call.1} parent=1 // loop_body
      %s17 = ssub.s32 %s12, 1
      %s18 = ssub.s32 %s12, 2
      %s19 = sadd.s32 %s12, 1
      %s20 = ssub.s32 %s12, %s19
      %p21 = scmp.eq.s32.totalorder %s20, 0
      %s23 = sadd.s32 %s22, 1
      %s24 = scalar_select %p21, %s22, %s23
      %p27 = pneg %p21
      %p28 = scmp.eq.s32.totalorder %s12, 1
      %p29 = por %p27, %p28
      %p30 = scmp.ne.s32.totalorder %s22, %s25
      %p31 = scmp.eq.s32.totalorder %s12, 0
      %p32 = por %p30, %p31
      %p33 = scmp.ne.s32.totalorder %s22, %s25
      %p34 = scmp.eq.s32.totalorder %s17, 1
      %p35 = por %p33, %p34
      %p36 = scmp.ne.s32.totalorder %s25, %s26
      %p37 = scmp.eq.s32.totalorder %s17, 0
      %p38 = por %p36, %p37
      %p39 = scmp.ne.s32.totalorder %s25, %s26
      %p40 = scmp.eq.s32.totalorder %s18, 1
      %p41 = por %p39, %p40
      %p43 = scmp.ne.s32.totalorder %s26, %s42
      %p44 = scmp.eq.s32.totalorder %s18, 0
      %p45 = por %p43, %p44
      %s47 = sadd.s32 %s46, 1
      %p50 = scmp.eq.s32.totalorder %s12, 1
      %p51 = scmp.ne.s32.totalorder %s46, %s48
      %p52 = scmp.eq.s32.totalorder %s12, 0
      %p53 = por %p51, %p52
      %p54 = scmp.ne.s32.totalorder %s46, %s48
      %p55 = scmp.eq.s32.totalorder %s17, 1
      %p56 = por %p54, %p55
      %p57 = scmp.ne.s32.totalorder %s48, %s49
      %p58 = scmp.eq.s32.totalorder %s17, 0
      %p59 = por %p57, %p58
      %p60 = scmp.ne.s32.totalorder %s48, %s49
      %p61 = scmp.eq.s32.totalorder %s18, 1
      %p62 = por %p60, %p61
      %p64 = scmp.ne.s32.totalorder %s49, %s63
      %p65 = scmp.eq.s32.totalorder %s18, 0
      %p66 = por %p64, %p65
      %s67 = ssub.s32 %s12, %s19
      %p68 = scmp.eq.s32.totalorder %s67, 0
      %s70 = sadd.s32 %s69, 1
      %s71 = scalar_select %p68, %s69, %s70
      %p74 = pneg %p68
      %p75 = scmp.eq.s32.totalorder %s12, 1
      %p76 = por %p74, %p75
      %p77 = scmp.ne.s32.totalorder %s69, %s72
      %p78 = scmp.eq.s32.totalorder %s12, 0
      %p79 = por %p77, %p78
      %p80 = scmp.ne.s32.totalorder %s69, %s72
      %p81 = scmp.eq.s32.totalorder %s17, 1
      %p82 = por %p80, %p81
      %p83 = scmp.ne.s32.totalorder %s72, %s73
      %p84 = scmp.eq.s32.totalorder %s17, 0
      %p85 = por %p83, %p84
      %p86 = scmp.ne.s32.totalorder %s72, %s73
      %p87 = scmp.eq.s32.totalorder %s18, 1
      %p88 = por %p86, %p87
      %p90 = scmp.ne.s32.totalorder %s73, %s89
      %p91 = scmp.eq.s32.totalorder %s18, 0
      %p92 = por %p90, %p91
      %s93 = ssub.s32 %s12, %s19
      %p94 = scmp.eq.s32.totalorder %s93, 0
      %s96 = sadd.s32 %s95, 1
      %s97 = scalar_select %p94, %s95, %s96
      %p100 = pneg %p94
      %p101 = scmp.eq.s32.totalorder %s12, 1
      %p102 = por %p100, %p101
      %p103 = scmp.ne.s32.totalorder %s95, %s98
      %p104 = scmp.eq.s32.totalorder %s12, 0
      %p105 = por %p103, %p104
      %p106 = scmp.ne.s32.totalorder %s95, %s98
      %p107 = scmp.eq.s32.totalorder %s17, 1
      %p108 = por %p106, %p107
      %p109 = scmp.ne.s32.totalorder %s98, %s99
      %p110 = scmp.eq.s32.totalorder %s17, 0
      %p111 = por %p109, %p110
      %p112 = scmp.ne.s32.totalorder %s98, %s99
      %p113 = scmp.eq.s32.totalorder %s18, 1
      %p114 = por %p112, %p113
      %p116 = scmp.ne.s32.totalorder %s99, %s115
      %p117 = scmp.eq.s32.totalorder %s18, 0
      %p118 = por %p116, %p117
      %p119 = scmp.le.s32.totalorder 1, %s12
      %p120 = scmp.lt.s32.totalorder %s12, 3
      %p121 = pnand %p119, %p120
      %p122 = pneg %p121
      // Predicated region
      $region9: #{tpu_custom_call.1} parent=5 // pred_check
        _
      $region10: #{tpu_custom_call.1} parent=5 // pred_check_branch
        %124 = sbr.rel (%p121) target = $region12
      $region11: #{tpu_custom_call.1} parent=5 // pred_region
        %s125 = ssub.s32 %s12, 1
        // Predicated region
        $region13: #{tpu_custom_call.1} parent=11 // pred_check
          %p126 = pneg %p59
        $region14: #{tpu_custom_call.1} parent=11 // pred_check_branch
          %128 = sbr.rel (%p126) target = $region16
        $region15: #{tpu_custom_call.1} parent=11 // pred_region
          _
        $region16: #{tpu_custom_call.1} parent=11 // pred_fallthru
          _
      $region12: #{tpu_custom_call.1} parent=5 // pred_fallthru
        _
      %p129 = scmp.lt.s32.totalorder %s12, 2
      // Predicated region
      $region17: #{tpu_custom_call.1} parent=5 // pred_check
        %p130 = pneg %p129
      $region18: #{tpu_custom_call.1} parent=5 // pred_check_branch
        %132 = sbr.rel (%p130) target = $region20
      $region19: #{tpu_custom_call.1} parent=5 // pred_region
        // Predicated region
        $region21: #{tpu_custom_call.1} parent=19 // pred_check
          %p133 = pneg %p32
        $region22: #{tpu_custom_call.1} parent=19 // pred_check_branch
          %135 = sbr.rel (%p133) target = $region24
        $region23: #{tpu_custom_call.1} parent=19 // pred_region
          %p136 = scmp.lt.s32.totalorder %s12, 1
          %s137 = scalar_select %p136, %s12, 1
          %s138 = smul.addr %s137, 8
          %s139 = scalar_lea.vmem %s0, %s138
        $region24: #{tpu_custom_call.1} parent=19 // pred_fallthru
          _
        // Predicated region
        $region25: #{tpu_custom_call.1} parent=19 // pred_check
          %p140 = pneg %p79
        $region26: #{tpu_custom_call.1} parent=19 // pred_check_branch
          %142 = sbr.rel (%p140) target = $region28
        $region27: #{tpu_custom_call.1} parent=19 // pred_region
          %p143 = scmp.lt.s32.totalorder %s12, 1
          %s144 = scalar_select %p143, %s12, 1
          %s145 = smul.addr %s144, 8
          %s146 = scalar_lea.vmem %s2, %s145
        $region28: #{tpu_custom_call.1} parent=19 // pred_fallthru
          _
      $region20: #{tpu_custom_call.1} parent=5 // pred_fallthru
        _
      %p147 = scmp.le.s32.totalorder 1, %s12
      %p148 = scmp.lt.s32.totalorder %s12, 3
      %p149 = pnand %p147, %p148
      %p150 = pneg %p149
      // Predicated region
      $region29: #{tpu_custom_call.1} parent=5 // pred_check
        _
      $region30: #{tpu_custom_call.1} parent=5 // pred_check_branch
        %152 = sbr.rel (%p149) target = $region32
      $region31: #{tpu_custom_call.1} parent=5 // pred_region
        %s153 = ssub.s32 %s12, 1
        %p154 = scmp.lt.s32.totalorder %s17, 1
        %s155 = scalar_select %p154, %s17, 1
        %s156 = smul.addr %s155, 8
        %s157 = scalar_lea.vmem %s0, %s156
        %p158 = pneg %p38
        %p159 = pneg %p35
        %p160 = pneg %p59
        %p161 = pneg %p56
        %p162 = scmp.lt.s32.totalorder %s17, 1
        %s163 = scalar_select %p162, %s17, 1
        %s164 = smul.addr %s163, 8
        %s165 = scalar_lea.vmem %s2, %s164
        %p166 = pneg %p85
        %p167 = pneg %p82
        %p168 = pneg %p111
        %p169 = pneg %p108
        %s170 = sand.u32 %s98, 1
        %s171 = scalar_lea.sflag [#allocation3], %s170
        %s172 = sand.u32 %s98, 1
        %s173 = smul.addr %s172, 8
        %s174 = scalar_lea.vmem [#allocation2], %s173
        %p175 = scmp.lt.s32.totalorder %s17, 1
        %s176 = scalar_select %p175, %s17, 1
        %s177 = smul.addr %s176, 8
        %s178 = scalar_lea.vmem %s0, %s177
        %p179 = scmp.lt.s32.totalorder %s17, 1
        %s180 = scalar_select %p179, %s17, 1
        %s181 = smul.addr %s180, 8
        %s182 = scalar_lea.vmem %s2, %s181
        %v183 = vld [vmem:[%s182] sm:$0xff]
        %v184 = vld [vmem:[%s178] sm:$0xff]
        %v185 = vld [vmem:[%s1] sm:$0x1]
        %187 = vset.pattern.permute.xlu0 0
        %188 = vperm.xlu0 %187, %v184
        %v189 = vpop.permute.xlu0 %188
        %v192 = vlaneseq
        %v193 = vshrl.u32 %v192, 7
        %v194 = vsub.s32 0, %v193
        %v195 = vrot.slane %v185, %v194
        %v197 = vmul.f32 %v189, %v195
        %v198 = vand.u32 2147483647, %v197
        %vm199 = vcmp.le.f32.partialorder %v198, 0.7853982
        %vm200 = vcmp.lt.s32.totalorder %v197, 0
        %v201 = vand.u32 %v197, 2139095040
        %v202 = vshrl.u32 %v201, 23
        %v203 = vsub.s32 %v202, 127
        %v204 = vand.u32 2147483647, %v197
        %v205 = vand.u32 %v204, 8388607
        %v206 = vor.u32 %v205, 8388608
        %v207 = vsub.s32 0, %v206
        %v208 = vadd.s32 %v203, 1
        %vm209 = vcmp.gt.s32.totalorder %v208, 0
        %v210 = vsel %vm209, %v208, 0
        %v211 = vshrl.u32 %v210, 5
        %v212 = vand.u32 %v210, 31
        %v213 = vsub.s32 32, %v212
        %v214 = vshrl.u32 683565275, %v213
        %v215 = vshll.u32 683565275, %v212
        %v216 = vshrl.u32 2475754826, %v213
        %v217 = vor.u32 %v215, %v216
        %v218 = vshll.u32 2475754826, %v212
        %v219 = vshrl.u32 2131351028, %v213
        %v220 = vor.u32 %v218, %v219
        %v221 = vshll.u32 2131351028, %v212
        %v222 = vshrl.u32 2102212464, %v213
        %v223 = vor.u32 %v221, %v222
        %v224 = vshll.u32 2102212464, %v212
        %v225 = vshrl.u32 920167782, %v213
        %v226 = vor.u32 %v224, %v225
        %v227 = vshll.u32 920167782, %v212
        %v228 = vshrl.u32 1326507024, %v213
        %v229 = vor.u32 %v227, %v228
        %vm230 = vcmp.lt.s32.totalorder %v211, 1
        %vm231 = vcmp.lt.s32.totalorder %v211, 2
        %vm232 = vcmp.lt.s32.totalorder %v211, 3
        %vm233 = vcmp.lt.s32.totalorder %v211, 4
        %v234 = vsel %vm230, %v214, %v217
        %v235 = vsel %vm233, %v223, 2102212464
        %v236 = vsel %vm232, %v220, %v235
        %v237 = vsel %vm231, %v234, %v236
        %v238 = vsel %vm230, %v217, %v220
        %v239 = vsel %vm233, %v226, 920167782
        %v240 = vsel %vm232, %v223, %v239
        %v241 = vsel %vm231, %v238, %v240
        %v242 = vsel %vm230, %v220, %v223
        %v243 = vsel %vm233, %v229, 1326507024
        %v244 = vsel %vm232, %v226, %v243
        %v245 = vsel %vm231, %v242, %v244
        %v246 = vshll.u32 %v206, 8
        %v247 = vmul.u32.u64.compose %v246, %v245
        %v248 = vextract.low.u32 %v247
        %v249 = vextract.high.u32 %v247
        %v250 = vmul.u32.u64.compose %v246, %v241
        %v251 = vextract.low.u32 %v250
        %v252 = vextract.high.u32 %v250
        %v253 = vmul.u32 %v246, %v237
        %v254 = vadd.s32 %v249, %v251
        %vm255 = vc.u32 %v249, %v251
        %v256 = vadd.s32 %v252, 1
        %v257 = vsel %vm255, %v256, %v252
        %v258 = vadd.s32 %v253, %v257
        %v259 = vadd.s32 %v258, 536870912
        %v260 = vshrl.u32 %v259, 30
        %v261 = vshll.u32 %v260, 30
        %v262 = vsub.s32 %v258, %v261
        %vm263 = vcmp.lt.s32.totalorder %v262, 0
        %v264 = vsub.s32 0, %v262
        %v265 = vsel %vm263, %v264, %v262
        %v266 = vclz %v265
        %v267 = vsub.s32 %v266, 2
        %vm268 = vcmp.gt.s32.totalorder 0, %v267
        %v269 = vsel %vm268, 0, %v267
        %v270 = vsub.s32 32, %v269
        %v271 = vshll.u32 %v262, %v269
        %v272 = vshrl.u32 %v254, %v270
        %v273 = vor.u32 %v271, %v272
        %v274 = vsub.s32 4294967266, %v269
        %v275 = vadd.s32 %v274, 127
        %v276 = vshll.u32 %v275, 23
        %v277 = vor.u32 4788187, %v276
        %v278 = vand.u32 2147483647, %v277
        %v280 = vcvt.s32.f32 %v273
        %v281 = vmul.f32 %v280, %v278
        %v282 = vxor.u32 %v281, 2147483648
        %v283 = vsel %vm200, %v282, %v281
        %v284 = vsub.s32 4, %v260
        %v285 = vsel %vm200, %v284, %v260
        %v286 = vsel %vm199, %v197, %v283
        %v287 = vsel %vm199, 0, %v285
        %v288 = vcosq.f32.pop %v286
        %v289 = vsinq.f32.pop %v286
        %vm290 = vweird.f32 %v197
        %v291 = vand.u32 %v287, 3
        %vm292 = vcmp.lt.s32.totalorder %v291, 2
        %vm293 = vcmp.eq.s32.totalorder %v291, 0
        %v294 = vxor.u32 %v289, 2147483648
        %v295 = vsel %vm293, %v288, %v294
        %vm296 = vcmp.eq.s32.totalorder %v291, 2
        %v297 = vxor.u32 %v288, 2147483648
        %v298 = vsel %vm296, %v297, %v289
        %v299 = vsel %vm292, %v295, %v298
        %v300 = vsel %vm290, nan, %v299
        %v301 = vand.u32 2147483647, %v197
        %vm302 = vcmp.le.f32.partialorder %v301, 0.7853982
        %vm303 = vcmp.lt.s32.totalorder %v197, 0
        %v304 = vand.u32 %v197, 2139095040
        %v305 = vshrl.u32 %v304, 23
        %v306 = vsub.s32 %v305, 127
        %v307 = vand.u32 2147483647, %v197
        %v308 = vand.u32 %v307, 8388607
        %v309 = vor.u32 %v308, 8388608
        %v310 = vsub.s32 0, %v309
        %v311 = vadd.s32 %v306, 1
        %vm312 = vcmp.gt.s32.totalorder %v311, 0
        %v313 = vsel %vm312, %v311, 0
        %v314 = vshrl.u32 %v313, 5
        %v315 = vand.u32 %v313, 31
        %v316 = vsub.s32 32, %v315
        %v317 = vshrl.u32 683565275, %v316
        %v318 = vshll.u32 683565275, %v315
        %v319 = vshrl.u32 2475754826, %v316
        %v320 = vor.u32 %v318, %v319
        %v321 = vshll.u32 2475754826, %v315
        %v322 = vshrl.u32 2131351028, %v316
        %v323 = vor.u32 %v321, %v322
        %v324 = vshll.u32 2131351028, %v315
        %v325 = vshrl.u32 2102212464, %v316
        %v326 = vor.u32 %v324, %v325
        %v327 = vshll.u32 2102212464, %v315
        %v328 = vshrl.u32 920167782, %v316
        %v329 = vor.u32 %v327, %v328
        %v330 = vshll.u32 920167782, %v315
        %v331 = vshrl.u32 1326507024, %v316
        %v332 = vor.u32 %v330, %v331
        %vm333 = vcmp.lt.s32.totalorder %v314, 1
        %vm334 = vcmp.lt.s32.totalorder %v314, 2
        %vm335 = vcmp.lt.s32.totalorder %v314, 3
        %vm336 = vcmp.lt.s32.totalorder %v314, 4
        %v337 = vsel %vm333, %v317, %v320
        %v338 = vsel %vm336, %v326, 2102212464
        %v339 = vsel %vm335, %v323, %v338
        %v340 = vsel %vm334, %v337, %v339
        %v341 = vsel %vm333, %v320, %v323
        %v342 = vsel %vm336, %v329, 920167782
        %v343 = vsel %vm335, %v326, %v342
        %v344 = vsel %vm334, %v341, %v343
        %v345 = vsel %vm333, %v323, %v326
        %v346 = vsel %vm336, %v332, 1326507024
        %v347 = vsel %vm335, %v329, %v346
        %v348 = vsel %vm334, %v345, %v347
        %v349 = vshll.u32 %v309, 8
        %v350 = vmul.u32.u64.compose %v349, %v348
        %v351 = vextract.low.u32 %v350
        %v352 = vextract.high.u32 %v350
        %v353 = vmul.u32.u64.compose %v349, %v344
        %v354 = vextract.low.u32 %v353
        %v355 = vextract.high.u32 %v353
        %v356 = vmul.u32 %v349, %v340
        %v357 = vadd.s32 %v352, %v354
        %vm358 = vc.u32 %v352, %v354
        %v359 = vadd.s32 %v355, 1
        %v360 = vsel %vm358, %v359, %v355
        %v361 = vadd.s32 %v356, %v360
        %v362 = vadd.s32 %v361, 536870912
        %v363 = vshrl.u32 %v362, 30
        %v364 = vshll.u32 %v363, 30
        %v365 = vsub.s32 %v361, %v364
        %vm366 = vcmp.lt.s32.totalorder %v365, 0
        %v367 = vsub.s32 0, %v365
        %v368 = vsel %vm366, %v367, %v365
        %v369 = vclz %v368
        %v370 = vsub.s32 %v369, 2
        %vm371 = vcmp.gt.s32.totalorder 0, %v370
        %v372 = vsel %vm371, 0, %v370
        %v373 = vsub.s32 32, %v372
        %v374 = vshll.u32 %v365, %v372
        %v375 = vshrl.u32 %v357, %v373
        %v376 = vor.u32 %v374, %v375
        %v377 = vsub.s32 4294967266, %v372
        %v378 = vadd.s32 %v377, 127
        %v379 = vshll.u32 %v378, 23
        %v380 = vor.u32 4788187, %v379
        %v381 = vand.u32 2147483647, %v380
        %v383 = vcvt.s32.f32 %v376
        %v384 = vmul.f32 %v383, %v381
        %v385 = vxor.u32 %v384, 2147483648
        %v386 = vsel %vm303, %v385, %v384
        %v387 = vsub.s32 4, %v363
        %v388 = vsel %vm303, %v387, %v363
        %v389 = vsel %vm302, %v197, %v386
        %v390 = vsel %vm302, 0, %v388
        %v391 = vcosq.f32.pop %v389
        %v392 = vsinq.f32.pop %v389
        %vm393 = vweird.f32 %v197
        %v394 = vadd.s32 %v390, 3
        %v395 = vand.u32 %v394, 3
        %vm396 = vcmp.lt.s32.totalorder %v395, 2
        %vm397 = vcmp.eq.s32.totalorder %v395, 0
        %v398 = vxor.u32 %v392, 2147483648
        %v399 = vsel %vm397, %v391, %v398
        %vm400 = vcmp.eq.s32.totalorder %v395, 2
        %v401 = vxor.u32 %v391, 2147483648
        %v402 = vsel %vm400, %v401, %v392
        %v403 = vsel %vm396, %v399, %v402
        %v404 = vsel %vm393, nan, %v403
        %vm405 = vcmask 1047808
        %406 = vrot.lane.b32.xlu0 %v183, 32
        %v407 = vpop.permute.xlu0 %406
        %v408 = vsel %vm405, %v407, %v183
        %409 = vrot.lane.b32.xlu0 %v408, 32
        %v410 = vpop.permute.xlu0 %409
        %v411 = vsel %vm405, %v410, %v183
        %v412 = vlaneseq
        %v413 = vand.u32 %v412, 127
        %v414 = vand.u32 %v413, 1
        %vm415 = vcmp.eq.s32.totalorder %v414, 0
        %417 = vrot.lane.b32.xlu0 %v411, 127
        %v418 = vpop.permute.xlu0 %417
        %420 = vrot.lane.b32.xlu0 %v411, 97
        %v421 = vpop.permute.xlu0 %420
        %v423 = vsel %vm415, %v418, %v421
        %v424 = vmul.f32 %v183, %v300
        %v425 = vmul.f32 %v423, %v404
        %v426 = vadd.f32 %v424, %v425
        %vm427 = vcmask 261120
        %428 = vst.msk [vmem:[%s174] sm:$0xff] %vm427, %v426
        %s429 = sand.u32 %s98, 1
        %s430 = scalar_lea.sflag [#allocation3], %s429
        %s431 = sand.u32 %s98, 1
        %s432 = smul.addr %s431, 8
        %s433 = scalar_lea.vmem [#allocation2], %s432
        // Predicated region
        $region33: #{tpu_custom_call.1} parent=31 // pred_check
          %p434 = pneg %p108
        $region34: #{tpu_custom_call.1} parent=31 // pred_check_branch
          %436 = sbr.rel (%p434) target = $region36
        $region35: #{tpu_custom_call.1} parent=31 // pred_region
          %s438 = ssub.s32 128, 128
          %439 = vsyncadd %s430, %s438
          %s440 = smul.addr %s17, 128
          %s441 = scalar_lea.hbm %s3, %s440
          %s443 = sshll.u32 %s433, 4
          %s444 = int_to_ptr.vmem [resolvable:$true] %s443
          %446 = dma.vmem_to_hbm [thread:$0]  %s444, 128, %s441, %s430
        $region36: #{tpu_custom_call.1} parent=31 // pred_fallthru
          _
      $region32: #{tpu_custom_call.1} parent=5 // pred_fallthru
        _
      %p447 = scmp.le.s32.totalorder 2, %s12
      // Predicated region
      $region37: #{tpu_custom_call.1} parent=5 // pred_check
        %p448 = pneg %p447
      $region38: #{tpu_custom_call.1} parent=5 // pred_check_branch
        %450 = sbr.rel (%p448) target = $region40
      $region39: #{tpu_custom_call.1} parent=5 // pred_region
        %s451 = ssub.s32 %s12, 2
        // Predicated region
        $region41: #{tpu_custom_call.1} parent=39 // pred_check
          %p452 = pneg %p114
        $region42: #{tpu_custom_call.1} parent=39 // pred_check_branch
          %454 = sbr.rel (%p452) target = $region44
        $region43: #{tpu_custom_call.1} parent=39 // pred_region
          %s455 = sand.u32 %s99, 1
          %s456 = scalar_lea.sflag [#allocation3], %s455
          %s457 = sand.u32 %s99, 1
          %s458 = smul.addr %s457, 8
          %s459 = scalar_lea.vmem [#allocation2], %s458
          %460 = dma.done %s456, 128
        $region44: #{tpu_custom_call.1} parent=39 // pred_fallthru
          _
      $region40: #{tpu_custom_call.1} parent=5 // pred_fallthru
        _
    $region6: #{tpu_custom_call.1} parent=1 // loop_footer
      %s16 = sadd.s32 1, %s12
    $region7: #{tpu_custom_call.1} parent=1 // loop_footer_branch
      %11 = sbr.rel target = $region3
    $region8: #{tpu_custom_call.1} parent=1 // loop_exit
      _
    %461 = vsyncpa [#allocation3], 1
    %s462 = scalar_lea.sflag [#allocation3], 1
    %463 = vsyncpa %s462, 1

</llo_original>
